<compile_context>
chip_gen: v7x
topology: tpu7x:2x2x1
jax: 0.10.0
libtpu: 0.0.40
codegen_flags: <defaults>
</compile_context>

<pallas_src>
import functools

import jax
import jax.numpy as jnp
from jax.experimental import pallas as pl
from jax.experimental.pallas import tpu as pltpu


def _distill_kl_kernel(s_ref, t_ref, out_ref, acc_ref, *, temperature: float,
                       scale: float):
    k = pl.program_id(1)  # reduction ("arbitrary") axis

    @pl.when(k == 0)
    def _():
        acc_ref[...] = jnp.zeros_like(acc_ref)

    inv_t = jnp.float32(1.0 / temperature)
    s = s_ref[...].astype(jnp.float32) * inv_t            # (TN, C) student logits / T
    t = t_ref[...].astype(jnp.float32) * inv_t            # (TN, C) teacher logits / T

    # Student log-softmax (max-subtracted).
    s_max = jnp.max(s, axis=1, keepdims=True)
    s_lse = jnp.log(jnp.sum(jnp.exp(s - s_max), axis=1, keepdims=True)) + s_max
    log_ps = s - s_lse                                    # (TN, C)

    # Teacher softmax / log-softmax from ONE exp (no second exp for p_t).
    t_max = jnp.max(t, axis=1, keepdims=True)
    t_shift = t - t_max
    e_t = jnp.exp(t_shift)                                # (TN, C)
    denom = jnp.sum(e_t, axis=1, keepdims=True)           # (TN, 1)
    log_pt = t_shift - jnp.log(denom)                     # (TN, C)
    # Exact reciprocal keeps 1e-5 parity with the reference; approx=True would
    # be fine for training but introduces ~1e-3 relative error in p_t.
    p_t = e_t * pl.reciprocal(denom, approx=False)        # (TN, C)

    # Per-row-tile KL contribution; fold into (8, C) with VPU-only adds
    # (no cross-lane XLU reduce, no output store in the steady state).
    kl = p_t * (log_pt - log_ps)                          # (TN, C)
    tn, c = kl.shape
    acc_ref[...] += jnp.sum(kl.reshape(tn // 8, 8, c), axis=0)

    @pl.when(k == pl.num_programs(1) - 1)
    def _():
        part = jnp.sum(acc_ref[...], axis=1, keepdims=True)   # (8, 1) lane reduce
        part = jnp.sum(part, axis=0, keepdims=True)           # (1, 1) sublane reduce
        out_ref[...] = jnp.zeros_like(out_ref) + part * jnp.float32(scale)


def _vmem_capacity_bytes() -> int:
    """Per-core VMEM capacity; conservative 64 MiB (v7x) fallback."""
    try:
        info = pltpu.get_tpu_info()
        return int(getattr(info, "vmem_capacity_bytes", 64 << 20))
    except Exception:  # CPU / interpret / older runtimes
        return 64 << 20


def _pick_row_block(n: int, bytes_per_row_buffered: int, num_parallel: int,
                    budget_bytes: int) -> int:
    """Largest row tile (multiple of 8) whose double-buffered input footprint
    fits the budget, without exceeding each core's share of the batch."""
    cap = max(8, budget_bytes // max(bytes_per_row_buffered, 1))
    cap = (cap // 8) * 8
    per_core = pl.cdiv(n, num_parallel)
    per_core = ((per_core + 7) // 8) * 8
    return max(8, min(cap, per_core, 4096))


def distill_kl(features_1_logits, features_2_logits, T: float = 4.0,
               row_block=None, num_parallel: int = 2):
    """features_*_logits: (N, C) float arrays (f32 or bf16). Returns scalar f32 loss."""
    n, c = features_1_logits.shape
    assert features_2_logits.shape == (n, c), "logit shapes must match"
    num_parallel = max(1, int(num_parallel))

    its1 = jnp.dtype(features_1_logits.dtype).itemsize
    its2 = jnp.dtype(features_2_logits.dtype).itemsize
    # Bytes/row for both inputs, double-buffered by the BlockSpec pipeline.
    bytes_per_row_buffered = 2 * c * (its1 + its2)

    vmem_cap = _vmem_capacity_bytes()
    budget = min(24 << 20, vmem_cap // 4)      # ~16 MiB on v7x (64 MiB/TC), 24 MiB on v5e/v6e

    if row_block is None:
        row_block = _pick_row_block(n, bytes_per_row_buffered, num_parallel, budget)
    else:
        # Enforce the VMEM cap and 8-row alignment even on explicit requests.
        row_block = max(8, (int(row_block) + 7) // 8 * 8)
        row_block = min(row_block, _pick_row_block(max(n, row_block),
                                                   bytes_per_row_buffered,
                                                   1, budget))

    # Ragged N: zero-pad the batch; identical all-zero student/teacher rows
    # contribute exactly 0 to the KL sum, so no masking is needed.
    chunk = row_block * num_parallel
    padded_n = pl.cdiv(n, chunk) * chunk
    pad = padded_n - n
    if pad:
        f1 = jnp.concatenate(
            [features_1_logits, jnp.zeros((pad, c), features_1_logits.dtype)], axis=0)
        f2 = jnp.concatenate(
            [features_2_logits, jnp.zeros((pad, c), features_2_logits.dtype)], axis=0)
    else:
        f1, f2 = features_1_logits, features_2_logits

    steps = padded_n // chunk                  # reduction steps per parallel slice

    needed = (row_block * bytes_per_row_buffered          # double-buffered inputs
              + 8 * c * 4                                 # f32 accumulator scratch
              + num_parallel * 8 * 128 * 4 * 2            # tiny outputs
              + (1 << 20))
    vmem_limit = int(min(vmem_cap, needed + (16 << 20)))

    kernel = functools.partial(
        _distill_kl_kernel,
        temperature=float(T),
        scale=float(T) ** 2 / float(n),        # original N, not padded
    )

    out = pl.pallas_call(
        kernel,
        out_shape=jax.ShapeDtypeStruct((num_parallel, 8, 128), jnp.float32),
        grid_spec=pltpu.PrefetchScalarGridSpec(
            num_scalar_prefetch=0,
            grid=(num_parallel, steps),
            in_specs=[
                pl.BlockSpec((row_block, c), lambda p, k: (p * steps + k, 0)),
                pl.BlockSpec((row_block, c), lambda p, k: (p * steps + k, 0)),
            ],
            out_specs=pl.BlockSpec((1, 8, 128), lambda p, k: (p, 0, 0)),
            scratch_shapes=[pltpu.VMEM((8, c), jnp.float32)],
        ),
        compiler_params=pltpu.CompilerParams(
            dimension_semantics=("parallel", "arbitrary"),
            vmem_limit_bytes=vmem_limit,
        ),
    )(f1, f2)

    # Each parallel slice broadcast its scaled partial across its (8,128) block.
    return jnp.sum(out[:, 0, 0])


def _reference(s_logits, t_logits, temperature):
    log_ps = jax.nn.log_softmax(s_logits.astype(jnp.float32) / temperature, axis=1)
    log_pt = jax.nn.log_softmax(t_logits.astype(jnp.float32) / temperature, axis=1)
    p_t = jnp.exp(log_pt)
    kl_sum = jnp.sum(p_t * (log_pt - log_ps))
    return kl_sum * temperature ** 2 / s_logits.shape[0]


if __name__ == "__main__":
    T = 4.0
    key = jax.random.PRNGKey(0)

    # Case 1: small lane-dense batch (N divides evenly across the 2 slices).
    N, C = 8, 128
    k1, k2, k3, k4 = jax.random.split(key, 4)
    f1 = jax.random.normal(k1, (N, C), dtype=jnp.float32)
    f2 = jax.random.normal(k2, (N, C), dtype=jnp.float32)
    out = jax.block_until_ready(distill_kl(f1, f2, T=T))
    ref = _reference(f1, f2, T)
    assert jnp.allclose(out, ref, atol=1e-5, rtol=1e-5), (out, ref)

    # Case 2: ragged batch (exercises the zero-padding path), wider C.
    N2, C2 = 13, 256
    g1 = jax.random.normal(k3, (N2, C2), dtype=jnp.float32)
    g2 = jax.random.normal(k4, (N2, C2), dtype=jnp.float32)
    out2 = jax.block_until_ready(distill_kl(g1, g2, T=T))
    ref2 = _reference(g1, g2, T)
    assert jnp.allclose(out2, ref2, atol=1e-5, rtol=1e-5), (out2, ref2)

    print("KERNEL_OK")
</pallas_src>

<mosaic_0001>
module attributes {stable_mosaic.version = 11 : i64} {
  func.func @_distill_kl_kernel(%arg0: i32, %arg1: i32, %arg2: memref<8x128xf32, #tpu.memory_space<vmem>>, %arg3: memref<8x128xf32, #tpu.memory_space<vmem>>, %arg4: memref<1x8x128xf32, #tpu.memory_space<vmem>>, %arg5: memref<8x128xf32, #tpu.memory_space<vmem>>) attributes {dimension_semantics = [#tpu.dimension_semantics<parallel>, #tpu.dimension_semantics<arbitrary>], iteration_bounds = array<i64: 2, 1>, scalar_prefetch = 0 : i64, scratch_operands = 1 : i64, tpu.core_type = #tpu.core_type<tc>, window_params = [{transform_indices = @transform_0, window_bounds = array<i64: 8, 128>}, {transform_indices = @transform_1, window_bounds = array<i64: 8, 128>}, {transform_indices = @transform_2, window_bounds = array<i64: 1, 8, 128>}]} {
    %c0_i32 = arith.constant 0 : i32
    %0 = arith.cmpi eq, %arg1, %c0_i32 : i32
    %1 = arith.extui %0 : i1 to i32
    %c0_i32_0 = arith.constant 0 : i32
    %2 = arith.cmpi ne, %1, %c0_i32_0 : i32
    scf.if %2 {
      %cst_16 = arith.constant 0.000000e+00 : f32
      %43 = vector.broadcast %cst_16 : f32 to vector<8x128xf32>
      %c0_17 = arith.constant 0 : index
      %c0_18 = arith.constant 0 : index
      %44 = vector.load %arg5[%c0_17, %c0_18] : memref<8x128xf32, #tpu.memory_space<vmem>>, vector<8x128xf32>
      tpu.vector_store %arg5[%c0_17, %c0_18], %43 {strides = array<i32>} : memref<8x128xf32, #tpu.memory_space<vmem>>, vector<8x128xf32>,
    } else {
    }
    %c0 = arith.constant 0 : index
    %c0_1 = arith.constant 0 : index
    %3 = vector.load %arg2[%c0, %c0_1] : memref<8x128xf32, #tpu.memory_space<vmem>>, vector<8x128xf32>
    %cst = arith.constant 2.500000e-01 : f32
    %4 = vector.broadcast %cst : f32 to vector<8x128xf32>
    %5 = arith.mulf %3, %4 : vector<8x128xf32>
    %c0_2 = arith.constant 0 : index
    %c0_3 = arith.constant 0 : index
    %6 = vector.load %arg3[%c0_2, %c0_3] : memref<8x128xf32, #tpu.memory_space<vmem>>, vector<8x128xf32>
    %cst_4 = arith.constant 2.500000e-01 : f32
    %7 = vector.broadcast %cst_4 : f32 to vector<8x128xf32>
    %8 = arith.mulf %6, %7 : vector<8x128xf32>
    %cst_5 = arith.constant dense<0xFF800000> : vector<8xf32>
    %9 = vector.multi_reduction <maximumf>, %5, %cst_5 [1] : vector<8x128xf32> to vector<8xf32>
    %10 = vector.shape_cast %9 : vector<8xf32> to vector<8x1xf32>
    %11 = vector.broadcast %10 : vector<8x1xf32> to vector<8x128xf32>
    %12 = arith.subf %5, %11 : vector<8x128xf32>
    %13 = math.exp %12 : vector<8x128xf32>
    %cst_6 = arith.constant dense<0.000000e+00> : vector<8xf32>
    %14 = vector.multi_reduction <add>, %13, %cst_6 [1] : vector<8x128xf32> to vector<8xf32>
    %15 = vector.shape_cast %14 : vector<8xf32> to vector<8x1xf32>
    %16 = math.log %15 : vector<8x1xf32>
    %17 = arith.addf %16, %10 : vector<8x1xf32>
    %18 = vector.broadcast %17 : vector<8x1xf32> to vector<8x128xf32>
    %19 = arith.subf %5, %18 : vector<8x128xf32>
    %cst_7 = arith.constant dense<0xFF800000> : vector<8xf32>
    %20 = vector.multi_reduction <maximumf>, %8, %cst_7 [1] : vector<8x128xf32> to vector<8xf32>
    %21 = vector.shape_cast %20 : vector<8xf32> to vector<8x1xf32>
    %22 = vector.broadcast %21 : vector<8x1xf32> to vector<8x128xf32>
    %23 = arith.subf %8, %22 : vector<8x128xf32>
    %24 = math.exp %23 : vector<8x128xf32>
    %cst_8 = arith.constant dense<0.000000e+00> : vector<8xf32>
    %25 = vector.multi_reduction <add>, %24, %cst_8 [1] : vector<8x128xf32> to vector<8xf32>
    %26 = vector.shape_cast %25 : vector<8xf32> to vector<8x1xf32>
    %27 = math.log %26 : vector<8x1xf32>
    %28 = vector.broadcast %27 : vector<8x1xf32> to vector<8x128xf32>
    %29 = arith.subf %23, %28 : vector<8x128xf32>
    %30 = tpu.reciprocal %26 : vector<8x1xf32> -> vector<8x1xf32>
    %31 = vector.broadcast %30 : vector<8x1xf32> to vector<8x128xf32>
    %32 = arith.mulf %24, %31 : vector<8x128xf32>
    %33 = arith.subf %29, %19 : vector<8x128xf32>
    %34 = arith.mulf %32, %33 : vector<8x128xf32>
    %c0_9 = arith.constant 0 : index
    %c0_10 = arith.constant 0 : index
    %35 = vector.load %arg5[%c0_9, %c0_10] : memref<8x128xf32, #tpu.memory_space<vmem>>, vector<8x128xf32>
    %36 = vector.shape_cast %34 : vector<8x128xf32> to vector<1x8x128xf32>
    %cst_11 = arith.constant dense<0.000000e+00> : vector<8x128xf32>
    %37 = vector.multi_reduction <add>, %36, %cst_11 [0] : vector<1x8x128xf32> to vector<8x128xf32>
    %38 = arith.addf %35, %37 : vector<8x128xf32>
    %c0_12 = arith.constant 0 : index
    %c0_13 = arith.constant 0 : index
    %39 = vector.load %arg5[%c0_12, %c0_13] : memref<8x128xf32, #tpu.memory_space<vmem>>, vector<8x128xf32>
    tpu.vector_store %arg5[%c0_12, %c0_13], %38 {strides = array<i32>} : memref<8x128xf32, #tpu.memory_space<vmem>>, vector<8x128xf32>,
    %c0_i32_14 = arith.constant 0 : i32
    %40 = arith.cmpi eq, %arg1, %c0_i32_14 : i32
    %41 = arith.extui %40 : i1 to i32
    %c0_i32_15 = arith.constant 0 : i32
    %42 = arith.cmpi ne, %41, %c0_i32_15 : i32
    scf.if %42 {
      %c0_16 = arith.constant 0 : index
      %c0_17 = arith.constant 0 : index
      %43 = vector.load %arg5[%c0_16, %c0_17] : memref<8x128xf32, #tpu.memory_space<vmem>>, vector<8x128xf32>
      %cst_18 = arith.constant dense<0.000000e+00> : vector<8xf32>
      %44 = vector.multi_reduction <add>, %43, %cst_18 [1] : vector<8x128xf32> to vector<8xf32>
      %45 = vector.shape_cast %44 : vector<8xf32> to vector<8x1xf32>
      %cst_19 = arith.constant dense<0.000000e+00> : vector<1xf32>
      %46 = vector.multi_reduction <add>, %45, %cst_19 [0] : vector<8x1xf32> to vector<1xf32>
      %47 = vector.shape_cast %46 : vector<1xf32> to vector<1x1xf32>
      %cst_20 = arith.constant 0.000000e+00 : f32
      %48 = vector.broadcast %cst_20 : f32 to vector<1x8x128xf32>
      %cst_21 = arith.constant 2.000000e+00 : f32
      %49 = vector.broadcast %cst_21 : f32 to vector<1x1xf32>
      %50 = arith.mulf %47, %49 : vector<1x1xf32>
      %51 = vector.shape_cast %50 : vector<1x1xf32> to vector<1x1x1xf32>
      %52 = vector.broadcast %51 : vector<1x1x1xf32> to vector<1x8x128xf32>
      %53 = arith.addf %48, %52 : vector<1x8x128xf32>
      %c0_22 = arith.constant 0 : index
      %c0_23 = arith.constant 0 : index
      %c0_24 = arith.constant 0 : index
      %54 = vector.load %arg4[%c0_22, %c0_23, %c0_24] : memref<1x8x128xf32, #tpu.memory_space<vmem>>, vector<1x8x128xf32>
      tpu.vector_store %arg4[%c0_22, %c0_23, %c0_24], %53 {strides = array<i32>} : memref<1x8x128xf32, #tpu.memory_space<vmem>>, vector<1x8x128xf32>,
    } else {
    }
    return
  }
  func.func @transform_0(%arg0: i32, %arg1: i32) -> (i32, i32) {
    %c1_i32 = arith.constant 1 : i32
    %0 = arith.muli %arg0, %c1_i32 : i32
    %1 = arith.addi %0, %arg1 : i32
    %c0_i32 = arith.constant 0 : i32
    %c0_i32_0 = arith.constant 0 : i32
    return %1, %c0_i32 : i32, i32
  }
  func.func @transform_1(%arg0: i32, %arg1: i32) -> (i32, i32) {
    %c1_i32 = arith.constant 1 : i32
    %0 = arith.muli %arg0, %c1_i32 : i32
    %1 = arith.addi %0, %arg1 : i32
    %c0_i32 = arith.constant 0 : i32
    %c0_i32_0 = arith.constant 0 : i32
    return %1, %c0_i32 : i32, i32
  }
  func.func @transform_2(%arg0: i32, %arg1: i32) -> (i32, i32, i32) {
    %c0_i32 = arith.constant 0 : i32
    %c0_i32_0 = arith.constant 0 : i32
    %c0_i32_1 = arith.constant 0 : i32
    return %arg0, %c0_i32, %c0_i32_0 : i32, i32, i32
  }
}

</mosaic_0001>

<llo_original>
// kernel: tpu_custom_call.1
$region0: #{tpu_custom_call.1}
  #allocation0 [shape = 'u32[]', space=smem, size = 0x4, offset = 0x4, fixed_abs, tag = 'smem constant byte address 0x4 - core index']
  #allocation1 [shape = 'u32[144,128]{1,0:T(1,128)}', space=vmem, size = 0x12000, scoped, tag = 'internal scratch']
  #allocation2 [shape = 'f32[8,128]{1,0:T(8,128)}', space=vmem, size = 0x1000, scoped, tag = 'scratch operand']
  %s0 = inlined_call_operand.hbm [shape: f32[16,128], index: 0, kind: input, shape index: {}]
  %s1 = inlined_call_operand.hbm [shape: f32[16,128], index: 1, kind: input, shape index: {}]
  %s2 = inlined_call_operand.hbm [shape: f32[2,8,128], index: 2, kind: output, shape index: {}]
  %s3 = sld [smem:[#allocation0]]
  $region57: #{tpu_custom_call.1} parent=0
    _
  %s5 = ssub.s32 1, %s3
  %s6 = scalar_select 0, %s5, %s3
  $region1: #{tpu_custom_call.1} parent=0
    #allocation3 [shape = 'u8[8192]{0}', space=vmem, size = 0x2000, scoped, tag = 'input window, operand 0']
    #allocation4 [shape = 's32[2]{0}', space=sflag, size = 0x8, scoped, tag = 'scoped memory for tpu_custom_call.1']
    #allocation5 [shape = 's32[2]{0}', space=sflag, size = 0x8, scoped, tag = 'scoped memory for tpu_custom_call.1']
    #allocation6 [shape = 'u8[8192]{0}', space=vmem, size = 0x2000, scoped, tag = 'input window, operand 1']
    #allocation7 [shape = 's32[2]{0}', space=sflag, size = 0x8, scoped, tag = 'scoped memory for tpu_custom_call.1']
    #allocation8 [shape = 'u8[8192]{0}', space=vmem, size = 0x2000, scoped, tag = 'output window, operand 0']
    %7 = vsyncpa [#allocation4], 0
    %s8 = scalar_lea.sflag [#allocation4], 1
    %9 = vsyncpa %s8, 0
    %10 = vsyncpa [#allocation7], 0
    %s11 = scalar_lea.sflag [#allocation7], 1
    %12 = vsyncpa %s11, 0
    %13 = vsyncpa [#allocation5], 0
    %s14 = scalar_lea.sflag [#allocation5], 1
    %15 = vsyncpa %s14, 0
    loop: start=0, step=1, limit=4
    $region2: #{tpu_custom_call.1} parent=1 // loop_pre_header
      _
    $region3: #{tpu_custom_call.1} parent=1 // loop_header
      %s17 = sphi 0, %s21
      %p18 = scmp.ge.s32.totalorder %s17, 4
      %s24 = sphi 0, %s36
      %s25 = sphi 0, %s32
      %s26 = sphi 0, %s24
      %s27 = sphi 0, %s25
      %s28 = sphi 0, %s26
      %s29 = sphi 0, %s27
      %s41 = sphi 0, %s43
      %s44 = sphi 0, %s41
      %s45 = sphi 0, %s44
      %s61 = sphi 0, %s45
      %s69 = sphi 0, %s71
      %s72 = sphi 0, %s69
      %s73 = sphi 0, %s72
      %s89 = sphi 0, %s73
      %s95 = sphi 0, %s97
      %s98 = sphi 0, %s95
      %s99 = sphi 0, %s98
      %s115 = sphi 0, %s99
    $region4: #{tpu_custom_call.1} parent=1 // loop_header_branch
      %20 = sbr.rel (%p18) target = $region8
    $region5: #{tpu_custom_call.1} parent=1 // loop_body
      %s22 = ssub.s32 %s17, 1
      %s23 = ssub.s32 %s17, 2
      %s30 = sadd.s32 1, %s25
      %p31 = scmp.ge.s32.totalorder %s30, 1
      %s32 = scalar_select %p31, 0, %s30
      %s33 = sadd.s32 1, %s24
      %s34 = scalar_select %p31, %s33, %s24
      %p35 = scmp.ge.s32.totalorder %s34, 2
      %s36 = scalar_select %p35, 0, %s34
      %s37 = sadd.s32 %s24, %s25
      %s38 = sadd.s32 %s36, %s32
      %s39 = ssub.s32 %s37, %s38
      %p40 = scmp.eq.s32.totalorder %s39, 0
      %s42 = sadd.s32 %s41, 1
      %s43 = scalar_select %p40, %s41, %s42
      %p46 = pneg %p40
      %p47 = scmp.eq.s32.totalorder %s17, 1
      %p48 = por %p46, %p47
      %p49 = scmp.ne.s32.totalorder %s41, %s44
      %p50 = scmp.eq.s32.totalorder %s17, 0
      %p51 = por %p49, %p50
      %p52 = scmp.ne.s32.totalorder %s41, %s44
      %p53 = scmp.eq.s32.totalorder %s22, 1
      %p54 = por %p52, %p53
      %p55 = scmp.ne.s32.totalorder %s44, %s45
      %p56 = scmp.eq.s32.totalorder %s22, 0
      %p57 = por %p55, %p56
      %p58 = scmp.ne.s32.totalorder %s44, %s45
      %p59 = scmp.eq.s32.totalorder %s23, 1
      %p60 = por %p58, %p59
      %p62 = scmp.ne.s32.totalorder %s45, %s61
      %p63 = scmp.eq.s32.totalorder %s23, 0
      %p64 = por %p62, %p63
      %s65 = sadd.s32 %s24, %s25
      %s66 = sadd.s32 %s36, %s32
      %s67 = ssub.s32 %s65, %s66
      %p68 = scmp.eq.s32.totalorder %s67, 0
      %s70 = sadd.s32 %s69, 1
      %s71 = scalar_select %p68, %s69, %s70
      %p74 = pneg %p68
      %p75 = scmp.eq.s32.totalorder %s17, 1
      %p76 = por %p74, %p75
      %p77 = scmp.ne.s32.totalorder %s69, %s72
      %p78 = scmp.eq.s32.totalorder %s17, 0
      %p79 = por %p77, %p78
      %p80 = scmp.ne.s32.totalorder %s69, %s72
      %p81 = scmp.eq.s32.totalorder %s22, 1
      %p82 = por %p80, %p81
      %p83 = scmp.ne.s32.totalorder %s72, %s73
      %p84 = scmp.eq.s32.totalorder %s22, 0
      %p85 = por %p83, %p84
      %p86 = scmp.ne.s32.totalorder %s72, %s73
      %p87 = scmp.eq.s32.totalorder %s23, 1
      %p88 = por %p86, %p87
      %p90 = scmp.ne.s32.totalorder %s73, %s89
      %p91 = scmp.eq.s32.totalorder %s23, 0
      %p92 = por %p90, %p91
      %s93 = ssub.s32 %s24, %s36
      %p94 = scmp.eq.s32.totalorder %s93, 0
      %s96 = sadd.s32 %s95, 1
      %s97 = scalar_select %p94, %s95, %s96
      %p100 = pneg %p94
      %p101 = scmp.eq.s32.totalorder %s17, 1
      %p102 = por %p100, %p101
      %p103 = scmp.ne.s32.totalorder %s95, %s98
      %p104 = scmp.eq.s32.totalorder %s17, 0
      %p105 = por %p103, %p104
      %p106 = scmp.ne.s32.totalorder %s95, %s98
      %p107 = scmp.eq.s32.totalorder %s22, 1
      %p108 = por %p106, %p107
      %p109 = scmp.ne.s32.totalorder %s98, %s99
      %p110 = scmp.eq.s32.totalorder %s22, 0
      %p111 = por %p109, %p110
      %p112 = scmp.ne.s32.totalorder %s98, %s99
      %p113 = scmp.eq.s32.totalorder %s23, 1
      %p114 = por %p112, %p113
      %p116 = scmp.ne.s32.totalorder %s99, %s115
      %p117 = scmp.eq.s32.totalorder %s23, 0
      %p118 = por %p116, %p117
      %p119 = scmp.le.s32.totalorder 1, %s17
      %p120 = scmp.lt.s32.totalorder %s17, 3
      %p121 = pnand %p119, %p120
      %p122 = pneg %p121
      // Predicated region
      $region9: #{tpu_custom_call.1} parent=5 // pred_check
        _
      $region10: #{tpu_custom_call.1} parent=5 // pred_check_branch
        %124 = sbr.rel (%p121) target = $region12
      $region11: #{tpu_custom_call.1} parent=5 // pred_region
        %s125 = ssub.s32 %s17, 1
      $region12: #{tpu_custom_call.1} parent=5 // pred_fallthru
        _
      %p126 = scmp.lt.s32.totalorder %s17, 2
      // Predicated region
      $region13: #{tpu_custom_call.1} parent=5 // pred_check
        %p127 = pneg %p126
      $region14: #{tpu_custom_call.1} parent=5 // pred_check_branch
        %129 = sbr.rel (%p127) target = $region16
      $region15: #{tpu_custom_call.1} parent=5 // pred_region
        // Predicated region
        $region17: #{tpu_custom_call.1} parent=15 // pred_check
          %p130 = pneg %p51
        $region18: #{tpu_custom_call.1} parent=15 // pred_check_branch
          %132 = sbr.rel (%p130) target = $region20
        $region19: #{tpu_custom_call.1} parent=15 // pred_region
          %s133 = sand.u32 %s41, 1
          %s134 = scalar_lea.sflag [#allocation4], %s133
          %s135 = sand.u32 %s41, 1
          %s136 = smul.addr %s135, 8
          %s137 = scalar_lea.vmem [#allocation3], %s136
          %s138 = sadd.s32 %s24, %s25
          %s140 = ssub.s32 128, 128
          %141 = vsyncadd %s134, %s140
          %s142 = smul.addr %s138, 128
          %s143 = scalar_lea.hbm %s0, %s142
          %s145 = sshll.u32 %s137, 4
          %s146 = int_to_ptr.vmem [resolvable:$true] %s145
          %148 = dma.hbm_to_vmem [thread:$0]  %s143, 128, %s146, %s134
        $region20: #{tpu_custom_call.1} parent=15 // pred_fallthru
          _
        // Predicated region
        $region21: #{tpu_custom_call.1} parent=15 // pred_check
          %p149 = pneg %p79
        $region22: #{tpu_custom_call.1} parent=15 // pred_check_branch
          %151 = sbr.rel (%p149) target = $region24
        $region23: #{tpu_custom_call.1} parent=15 // pred_region
          %s152 = sand.u32 %s69, 1
          %s153 = scalar_lea.sflag [#allocation7], %s152
          %s154 = sand.u32 %s69, 1
          %s155 = smul.addr %s154, 8
          %s156 = scalar_lea.vmem [#allocation6], %s155
          %s157 = sadd.s32 %s24, %s25
          %s159 = ssub.s32 128, 128
          %160 = vsyncadd %s153, %s159
          %s161 = smul.addr %s157, 128
          %s162 = scalar_lea.hbm %s1, %s161
          %s164 = sshll.u32 %s156, 4
          %s165 = int_to_ptr.vmem [resolvable:$true] %s164
          %167 = dma.hbm_to_vmem [thread:$0]  %s162, 128, %s165, %s153
        $region24: #{tpu_custom_call.1} parent=15 // pred_fallthru
          _
      $region16: #{tpu_custom_call.1} parent=5 // pred_fallthru
        _
      %p168 = scmp.le.s32.totalorder 1, %s17
      %p169 = scmp.lt.s32.totalorder %s17, 3
      %p170 = pnand %p168, %p169
      %p171 = pneg %p170
      // Predicated region
      $region25: #{tpu_custom_call.1} parent=5 // pred_check
        _
      $region26: #{tpu_custom_call.1} parent=5 // pred_check_branch
        %173 = sbr.rel (%p170) target = $region28
      $region27: #{tpu_custom_call.1} parent=5 // pred_region
        %s174 = ssub.s32 %s17, 1
        %s175 = sand.u32 %s44, 1
        %s176 = scalar_lea.sflag [#allocation4], %s175
        %s177 = sand.u32 %s44, 1
        %s178 = smul.addr %s177, 8
        %s179 = scalar_lea.vmem [#allocation3], %s178
        // Predicated region
        $region29: #{tpu_custom_call.1} parent=27 // pred_check
          %p180 = pneg %p57
        $region30: #{tpu_custom_call.1} parent=27 // pred_check_branch
          %182 = sbr.rel (%p180) target = $region32
        $region31: #{tpu_custom_call.1} parent=27 // pred_region
          %183 = dma.done %s176, 128
        $region32: #{tpu_custom_call.1} parent=27 // pred_fallthru
          _
        %s184 = sand.u32 %s72, 1
        %s185 = scalar_lea.sflag [#allocation7], %s184
        %s186 = sand.u32 %s72, 1
        %s187 = smul.addr %s186, 8
        %s188 = scalar_lea.vmem [#allocation6], %s187
        // Predicated region
        $region33: #{tpu_custom_call.1} parent=27 // pred_check
          %p189 = pneg %p85
        $region34: #{tpu_custom_call.1} parent=27 // pred_check_branch
          %191 = sbr.rel (%p189) target = $region36
        $region35: #{tpu_custom_call.1} parent=27 // pred_region
          %192 = dma.done %s185, 128
        $region36: #{tpu_custom_call.1} parent=27 // pred_fallthru
          _
        %s193 = sand.u32 %s44, 1
        %s194 = scalar_lea.sflag [#allocation4], %s193
        %s195 = sand.u32 %s44, 1
        %s196 = smul.addr %s195, 8
        %s197 = scalar_lea.vmem [#allocation3], %s196
        %p198 = pneg %p57
        %p199 = pneg %p54
        %s200 = sand.u32 %s72, 1
        %s201 = scalar_lea.sflag [#allocation7], %s200
        %s202 = sand.u32 %s72, 1
        %s203 = smul.addr %s202, 8
        %s204 = scalar_lea.vmem [#allocation6], %s203
        %p205 = pneg %p85
        %p206 = pneg %p82
        %p207 = pneg %p111
        %p208 = pneg %p108
        %s209 = sand.u32 %s98, 1
        %s210 = scalar_lea.sflag [#allocation5], %s209
        %s211 = sand.u32 %s98, 1
        %s212 = smul.addr %s211, 8
        %s213 = scalar_lea.vmem [#allocation8], %s212
        %s214 = sadd.s32 %s26, %s27
        %s215 = sadd.s32 %s26, %s27
        %p216 = scmp.eq.s32.totalorder %s27, 0
        // Predicated region
        $region37: #{tpu_custom_call.1} parent=27 // pred_check
          %p217 = pneg %p216
        $region38: #{tpu_custom_call.1} parent=27 // pred_check_branch
          %219 = sbr.rel (%p217) target = $region40
        $region39: #{tpu_custom_call.1} parent=27 // pred_region
          %220 = vst [vmem:[#allocation2] sm:$0xff] 0.0
        $region40: #{tpu_custom_call.1} parent=27 // pred_fallthru
          _
        %v221 = vld [vmem:[%s179] sm:$0xff]
        %v222 = vmul.f32 %v221, 0.25
        %v223 = vld [vmem:[%s188] sm:$0xff]
        %v224 = vmul.f32 %v223, 0.25
        %225 = vmax.xlane.f32.xlu0 %v222
        %v226 = vpop.xlane.xlu0 %225
        %v227 = vsub.f32 %v222, %v226
        %v228 = vmul.f32 %v227, 1.442695
        %v229 = vpow.pop %v228
        %230 = vadd.xlane.f32.xlu0 %v229
        %v231 = vpop.xlane.xlu0 %230
        %v232 = vlog2.pop %v231
        %v233 = vmul.f32 %v232, 0.6931472
        %v234 = vadd.f32 %v233, %v226
        %v235 = vsub.f32 %v222, %v234
        %236 = vmax.xlane.f32.xlu0 %v224
        %v237 = vpop.xlane.xlu0 %236
        %v238 = vsub.f32 %v224, %v237
        %v239 = vmul.f32 %v238, 1.442695
        %v240 = vpow.pop %v239
        %241 = vadd.xlane.f32.xlu0 %v240
        %v242 = vpop.xlane.xlu0 %241
        %v243 = vlog2.pop %v242
        %v244 = vmul.f32 %v243, 0.6931472
        %v245 = vsub.f32 %v238, %v244
        %v246 = vrcp.pop %v242
        %v247 = vmul.f32 %v240, %v246
        %v248 = vsub.f32 %v245, %v235
        %v249 = vmul.f32 %v247, %v248
        %v250 = vld [vmem:[#allocation2] sm:$0xff]
        %v251 = vadd.f32 %v249, 0.0
        %v252 = vadd.f32 %v250, %v251
        %253 = vst [vmem:[#allocation2] sm:$0xff] %v252
        // Predicated region
        $region41: #{tpu_custom_call.1} parent=27 // pred_check
          %p254 = pneg %p216
        $region42: #{tpu_custom_call.1} parent=27 // pred_check_branch
          %256 = sbr.rel (%p254) target = $region44
        $region43: #{tpu_custom_call.1} parent=27 // pred_region
          %v257 = vld [vmem:[#allocation2] sm:$0xff]
          %258 = vadd.xlane.f32.xlu0 %v257
          %v259 = vpop.xlane.xlu0 %258
          %v260 = vrot.slane %v259, 4
          %v261 = vadd.f32 %v259, %v260
          %v262 = vrot.slane %v261, 2
          %v263 = vadd.f32 %v261, %v262
          %v264 = vrot.slane %v263, 1
          %v265 = vadd.f32 %v263, %v264
          %v266 = vmul.f32 %v265, 2.0
          %v267 = vadd.f32 %v266, 0.0
          %268 = vst [vmem:[%s213] sm:$0xff] %v267
        $region44: #{tpu_custom_call.1} parent=27 // pred_fallthru
          _
        %s269 = sand.u32 %s98, 1
        %s270 = scalar_lea.sflag [#allocation5], %s269
        %s271 = sand.u32 %s98, 1
        %s272 = smul.addr %s271, 8
        %s273 = scalar_lea.vmem [#allocation8], %s272
        // Predicated region
        $region45: #{tpu_custom_call.1} parent=27 // pred_check
          %p274 = pneg %p108
        $region46: #{tpu_custom_call.1} parent=27 // pred_check_branch
          %276 = sbr.rel (%p274) target = $region48
        $region47: #{tpu_custom_call.1} parent=27 // pred_region
          %s278 = ssub.s32 128, 128
          %279 = vsyncadd %s270, %s278
          %s280 = smul.addr %s26, 128
          %s281 = scalar_lea.hbm %s2, %s280
          %s283 = sshll.u32 %s273, 4
          %s284 = int_to_ptr.vmem [resolvable:$true] %s283
          %286 = dma.vmem_to_hbm [thread:$0]  %s284, 128, %s281, %s270
        $region48: #{tpu_custom_call.1} parent=27 // pred_fallthru
          _
      $region28: #{tpu_custom_call.1} parent=5 // pred_fallthru
        _
      %p287 = scmp.le.s32.totalorder 2, %s17
      // Predicated region
      $region49: #{tpu_custom_call.1} parent=5 // pred_check
        %p288 = pneg %p287
      $region50: #{tpu_custom_call.1} parent=5 // pred_check_branch
        %290 = sbr.rel (%p288) target = $region52
      $region51: #{tpu_custom_call.1} parent=5 // pred_region
        %s291 = ssub.s32 %s17, 2
        // Predicated region
        $region53: #{tpu_custom_call.1} parent=51 // pred_check
          %p292 = pneg %p114
        $region54: #{tpu_custom_call.1} parent=51 // pred_check_branch
          %294 = sbr.rel (%p292) target = $region56
        $region55: #{tpu_custom_call.1} parent=51 // pred_region
          %s295 = sand.u32 %s99, 1
          %s296 = scalar_lea.sflag [#allocation5], %s295
          %s297 = sand.u32 %s99, 1
          %s298 = smul.addr %s297, 8
          %s299 = scalar_lea.vmem [#allocation8], %s298
          %300 = dma.done %s296, 128
        $region56: #{tpu_custom_call.1} parent=51 // pred_fallthru
          _
      $region52: #{tpu_custom_call.1} parent=5 // pred_fallthru
        _
    $region6: #{tpu_custom_call.1} parent=1 // loop_footer
      %s21 = sadd.s32 1, %s17
    $region7: #{tpu_custom_call.1} parent=1 // loop_footer_branch
      %16 = sbr.rel target = $region3
    $region8: #{tpu_custom_call.1} parent=1 // loop_exit
      _
    %301 = vsyncpa [#allocation4], 1
    %s302 = scalar_lea.sflag [#allocation4], 1
    %303 = vsyncpa %s302, 1
    %304 = vsyncpa [#allocation7], 1
    %s305 = scalar_lea.sflag [#allocation7], 1
    %306 = vsyncpa %s305, 1
    %307 = vsyncpa [#allocation5], 1
    %s308 = scalar_lea.sflag [#allocation5], 1
    %309 = vsyncpa %s308, 1

</llo_original>
